<compile_context>
chip_gen: v5e
topology: v5e:2x2
jax: 0.10.0
libtpu: 0.0.40
codegen_flags: <defaults>
</compile_context>

<pallas_src>
import functools

import jax
import jax.numpy as jnp
from jax import lax
from jax.experimental import pallas as pl
from jax.experimental.pallas import tpu as pltpu


def _round_up(x, m):
    return (x + m - 1) // m * m


def _vmem_limit_bytes():
    """Half of physical VMEM per generation (32 MiB on v7x's 64 MiB, 64 MiB on
    v5e/v6e's 128 MiB), with a safe fallback when the query is unavailable."""
    default = 64 * 1024 * 1024
    try:
        cap = int(getattr(pltpu.get_tpu_info(), "vmem_capacity_bytes", default))
    except Exception:
        cap = default
    return max(32 * 1024 * 1024, min(96 * 1024 * 1024, cap // 2))


_VMEM_LIMIT = _vmem_limit_bytes()


def _node_tiling(n):
    """Pick (n_pad, row_tile, k_tile) for the A_hat @ H propagate: 512-wide k tiles
    (HBM-streaming sweet spot), 256-row tiles matching the f32 accumulator/MXU."""
    if n >= 512:
        n_pad = _round_up(n, 512)
        k_tile = 512
    else:
        n_pad = _round_up(n, 128)
        k_tile = n_pad
    row_tile = 256 if n_pad % 256 == 0 else 128
    return n_pad, row_tile, k_tile


# --------------------------------------------------------------------------
# Kernel 1: row-tiled linear   H = X @ W   (bf16 in, f32 accumulate, bf16 out)
# --------------------------------------------------------------------------
def _linear_kernel(x_ref, w_ref, o_ref):
    o_ref[...] = jnp.dot(x_ref[...], w_ref[...],
                         preferred_element_type=jnp.float32).astype(o_ref.dtype)


def linear(x, w, *, tile_m):
    n, c_in = x.shape
    c_out = w.shape[1]
    flops = 2 * n * c_in * c_out
    bytes_accessed = int(x.size) * 2 + int(w.size) * 2 + n * c_out * 2
    return pl.pallas_call(
        _linear_kernel,
        out_shape=jax.ShapeDtypeStruct((n, c_out), jnp.bfloat16),
        grid_spec=pltpu.PrefetchScalarGridSpec(
            num_scalar_prefetch=0,
            grid=(n // tile_m,),
            in_specs=[pl.BlockSpec((tile_m, c_in), lambda i: (i, 0)),
                      pl.BlockSpec((c_in, c_out), lambda i: (0, 0))],
            out_specs=pl.BlockSpec((tile_m, c_out), lambda i: (i, 0))),
        compiler_params=pltpu.CompilerParams(
            dimension_semantics=("parallel",),
            vmem_limit_bytes=_VMEM_LIMIT),
        cost_estimate=pl.CostEstimate(flops=int(flops), transcendentals=0,
                                      bytes_accessed=int(bytes_accessed)),
    )(x, w)


# --------------------------------------------------------------------------
# Kernel 2: tiled GCN propagate   out = A_hat[:rows] @ H + b   (+ optional ReLU)
#           optionally fused with the NEXT layer's linear:
#           out = relu(A_hat[:rows] @ H + b) @ W_next
#   H is fully VMEM-resident (constant index_map); k chunks sliced in-kernel.
# --------------------------------------------------------------------------
def _propagate_kernel(a_ref, h_ref, b_ref, o_ref, acc_ref, *, k_tile, apply_relu):
    k = pl.program_id(1)

    @pl.when(k == 0)
    def _():
        acc_ref[...] = jnp.zeros_like(acc_ref)

    h_k = h_ref[pl.ds(pl.multiple_of(k * k_tile, k_tile), k_tile), :]
    acc_ref[...] += jnp.dot(a_ref[...], h_k, preferred_element_type=jnp.float32)

    @pl.when(k == pl.num_programs(1) - 1)
    def _():
        out = acc_ref[...] + b_ref[...]          # bias broadcast over the row tile
        if apply_relu:
            out = jnp.maximum(out, 0.0)
        o_ref[...] = out.astype(o_ref.dtype)


def _propagate_fused_linear_kernel(a_ref, h_ref, b_ref, w_next_ref, o_ref, acc_ref,
                                   *, k_tile):
    k = pl.program_id(1)

    @pl.when(k == 0)
    def _():
        acc_ref[...] = jnp.zeros_like(acc_ref)

    h_k = h_ref[pl.ds(pl.multiple_of(k * k_tile, k_tile), k_tile), :]
    acc_ref[...] += jnp.dot(a_ref[...], h_k, preferred_element_type=jnp.float32)

    @pl.when(k == pl.num_programs(1) - 1)
    def _():
        x_out = jnp.maximum(acc_ref[...] + b_ref[...], 0.0)   # ReLU; dropout = identity
        o_ref[...] = jnp.dot(x_out.astype(jnp.bfloat16), w_next_ref[...],
                             preferred_element_type=jnp.float32).astype(o_ref.dtype)


def propagate(a_hat, h, bias, *, rows, row_tile, k_tile, apply_relu,
              w_next=None, out_dtype=jnp.bfloat16):
    n_pad = a_hat.shape[1]
    c = h.shape[1]
    rows_pad = _round_up(rows, row_tile)
    assert rows_pad <= a_hat.shape[0] and n_pad % k_tile == 0
    b2d = bias.reshape(1, c).astype(jnp.float32)

    in_specs = [pl.BlockSpec((row_tile, k_tile), lambda i, k: (i, k)),
                pl.BlockSpec((n_pad, c), lambda i, k: (0, 0)),   # H resident in VMEM
                pl.BlockSpec((1, c), lambda i, k: (0, 0))]
    inputs = [a_hat, h, b2d]
    flops = 2 * rows_pad * n_pad * c
    bytes_accessed = rows_pad * n_pad * 2 + n_pad * c * 2

    if w_next is None:
        kernel = functools.partial(_propagate_kernel, k_tile=k_tile,
                                   apply_relu=apply_relu)
        c_out = c
    else:
        kernel = functools.partial(_propagate_fused_linear_kernel, k_tile=k_tile)
        c_out = w_next.shape[1]
        in_specs.append(pl.BlockSpec((c, c_out), lambda i, k: (0, 0)))
        inputs.append(w_next)
        flops += 2 * rows_pad * c * c_out
    bytes_accessed += rows_pad * c_out * int(jnp.dtype(out_dtype).itemsize)

    return pl.pallas_call(
        kernel,
        out_shape=jax.ShapeDtypeStruct((rows_pad, c_out), out_dtype),
        grid_spec=pltpu.PrefetchScalarGridSpec(
            num_scalar_prefetch=0,
            grid=(rows_pad // row_tile, n_pad // k_tile),
            in_specs=in_specs,
            out_specs=pl.BlockSpec((row_tile, c_out), lambda i, k: (i, 0)),
            scratch_shapes=[pltpu.VMEM((row_tile, c), jnp.float32)]),
        compiler_params=pltpu.CompilerParams(
            dimension_semantics=("parallel", "arbitrary"),
            vmem_limit_bytes=_VMEM_LIMIT),
        cost_estimate=pl.CostEstimate(flops=int(flops), transcendentals=0,
                                      bytes_accessed=int(bytes_accessed)),
    )(*inputs)


# --------------------------------------------------------------------------
# Kernel 3: InnerProductDecoder + masked log_softmax on z = x2[:n_target],
#           tiled over (row, col) blocks of z so prod never has to fit in one
#           VMEM block; log_softmax only on the j == 0 column of the grid.
# --------------------------------------------------------------------------
def _decoder_kernel(zi_ref, zj_ref, ls_ref, prod_ref, *, c_valid):
    zi = zi_ref[...].astype(jnp.float32)
    zj = zj_ref[...].astype(jnp.float32)
    # InnerProductDecoder (act = identity): contract the feature axis on the MXU.
    prod_ref[...] = lax.dot_general(zi, zj,
                                    dimension_numbers=(((1,), (1,)), ((), ())),
                                    preferred_element_type=jnp.float32)

    @pl.when(pl.program_id(1) == 0)
    def _():
        # Numerically stable log_softmax over the valid (unpadded) feature lanes.
        lane = lax.broadcasted_iota(jnp.int32, zi.shape, 1)
        valid = lane < c_valid
        zm = jnp.where(valid, zi, -1e30)
        m = jnp.max(zm, axis=-1, keepdims=True)
        shifted = zm - m
        sumexp = jnp.sum(jnp.where(valid, jnp.exp(shifted), 0.0), axis=-1,
                         keepdims=True)
        ls_ref[...] = shifted - jnp.log(sumexp)


def decode(x2, n_target, c_valid):
    nt_pad, c_pad = x2.shape
    dec_tile = 256 if nt_pad % 256 == 0 else 128
    kernel = functools.partial(_decoder_kernel, c_valid=c_valid)
    flops = 2 * nt_pad * nt_pad * c_pad
    bytes_accessed = nt_pad * c_pad * 4 * 2 + nt_pad * nt_pad * 4
    log_probs, prod = pl.pallas_call(
        kernel,
        out_shape=(jax.ShapeDtypeStruct((nt_pad, c_pad), jnp.float32),
                   jax.ShapeDtypeStruct((nt_pad, nt_pad), jnp.float32)),
        grid_spec=pltpu.PrefetchScalarGridSpec(
            num_scalar_prefetch=0,
            grid=(nt_pad // dec_tile, nt_pad // dec_tile),
            in_specs=[pl.BlockSpec((dec_tile, c_pad), lambda i, j: (i, 0)),
                      pl.BlockSpec((dec_tile, c_pad), lambda i, j: (j, 0))],
            out_specs=(pl.BlockSpec((dec_tile, c_pad), lambda i, j: (i, 0)),
                       pl.BlockSpec((dec_tile, dec_tile), lambda i, j: (i, j)))),
        compiler_params=pltpu.CompilerParams(
            dimension_semantics=("parallel", "arbitrary"),
            vmem_limit_bytes=_VMEM_LIMIT),
        cost_estimate=pl.CostEstimate(flops=int(flops),
                                      transcendentals=int(nt_pad * c_pad),
                                      bytes_accessed=int(bytes_accessed)),
    )(x2, x2)
    return log_probs[:n_target, :c_valid], prod[:n_target, :n_target]


# --------------------------------------------------------------------------
# Net.forward equivalent
# --------------------------------------------------------------------------
def net_forward(x, a_hats, weights, biases, n_target):
    """x: (N, in_channels); a_hats: list of (N, N) symmetric-normalized dense adjacencies
    (D^-1/2 (A+I) D^-1/2, one per sampled layer); weights/biases: GCNConv parameters."""
    num_layers = len(a_hats)
    n = a_hats[0].shape[0]
    n_pad, row_tile, k_tile = _node_tiling(n)

    # Pad once to lane-dense (multiple-of-128) feature dims and tile-aligned node count,
    # in bf16 (zero padding keeps all padded rows/cols mathematically inert).
    c_in = x.shape[1]
    c_in_pad = _round_up(c_in, 128)
    x_p = jnp.zeros((n_pad, c_in_pad), jnp.bfloat16).at[:n, :c_in].set(
        x.astype(jnp.bfloat16))
    a_p = [jnp.zeros((n_pad, n_pad), jnp.bfloat16).at[:n, :n].set(a.astype(jnp.bfloat16))
           for a in a_hats]
    w_p, b_p = [], []
    for w, b in zip(weights, biases):
        ci, co = w.shape
        ci_pad, co_pad = _round_up(ci, 128), _round_up(co, 128)
        w_p.append(jnp.zeros((ci_pad, co_pad), jnp.bfloat16).at[:ci, :co].set(
            w.astype(jnp.bfloat16)))
        b_p.append(jnp.zeros((co_pad,), jnp.float32).at[:co].set(b.astype(jnp.float32)))

    # H1 = X @ W1  (cheap row-tiled kernel; O(N*C) vs the O(N^2) adjacency work).
    h = linear(x_p, w_p[0], tile_m=min(n_pad, 512))

    # Layers 0..L-2 fused:  H_{i+1} = relu(A_i @ H_i + b_i) @ W_{i+1}
    # (all n_pad rows needed: they are the source nodes of the next layer).
    for i in range(num_layers - 1):
        h = propagate(a_p[i], h, b_p[i], rows=n_pad, row_tile=row_tile, k_tile=k_tile,
                      apply_relu=True, w_next=w_p[i + 1], out_dtype=jnp.bfloat16)
        # TODO(synk): training-mode dropout(p=0.5) would be applied here.

    # Last layer restricted to the first n_target output rows (only rows the decoder
    # consumes): x2 = A_L[:nt] @ H_L + b_L  (no ReLU), kept f32 for the decoder.
    # Drop to 128-row tiles when a 256 tile would leave a TensorCore idle on v7x.
    last_row_tile = 128 if (row_tile > 128 and n_target <= row_tile) else row_tile
    x2 = propagate(a_p[-1], h, b_p[-1], rows=n_target, row_tile=last_row_tile,
                   k_tile=k_tile, apply_relu=False, w_next=None,
                   out_dtype=jnp.float32)

    c_out = weights[-1].shape[1]
    return decode(x2, n_target, c_out)


# --------------------------------------------------------------------------
# Deterministic inputs + smoke test
# --------------------------------------------------------------------------
def normalized_adjacency(key, n):
    """Random symmetric binary adjacency -> D^{-1/2}(A+I)D^{-1/2}."""
    a = (jax.random.uniform(key, (n, n)) > 0.7).astype(jnp.float32)
    a = jnp.maximum(a, a.T)
    a = a + jnp.eye(n, dtype=jnp.float32)
    deg = jnp.sum(a, axis=1)
    d = 1.0 / jnp.sqrt(deg)
    return a * d[:, None] * d[None, :]


if __name__ == "__main__":
    N = 512            # nodes in the sampled subgraph
    IN_CH, HID_CH, OUT_CH = 8, 32, 16
    N_TARGET = 128     # size[1] of the final sampled adjacency (target nodes)

    key = jax.random.PRNGKey(0)
    k_x, k_a1, k_a2, k_w1, k_w2 = jax.random.split(key, 5)

    x = jax.random.normal(k_x, (N, IN_CH), dtype=jnp.float32)
    a1 = normalized_adjacency(k_a1, N)
    a2 = normalized_adjacency(k_a2, N)

    w1 = jax.random.normal(k_w1, (IN_CH, HID_CH), jnp.float32) * jnp.sqrt(2.0 / (IN_CH + HID_CH))
    b1 = jnp.zeros((HID_CH,), jnp.float32)
    w2 = jax.random.normal(k_w2, (HID_CH, OUT_CH), jnp.float32) * jnp.sqrt(2.0 / (HID_CH + OUT_CH))
    b2 = jnp.zeros((OUT_CH,), jnp.float32)

    log_probs, x_product = net_forward(x, [a1, a2], [w1, w2], [b1, b2], N_TARGET)
    jax.block_until_ready((log_probs, x_product))

    # Pure-JAX f32 reference (loose tolerances: kernel inputs are bf16, accumulation f32).
    x1_ref = jnp.maximum(a1 @ (x @ w1) + b1, 0.0)
    x2_ref = a2 @ (x1_ref @ w2) + b2
    z_ref = x2_ref[:N_TARGET]
    lp_ref = jax.nn.log_softmax(z_ref, axis=-1)
    prod_ref = z_ref @ z_ref.T

    assert log_probs.shape == (N_TARGET, OUT_CH)
    assert x_product.shape == (N_TARGET, N_TARGET)
    assert jnp.allclose(jnp.sum(jnp.exp(log_probs), axis=-1), 1.0, atol=1e-4)
    assert float(jnp.max(jnp.abs(log_probs - lp_ref))) < 1e-1, "log_softmax mismatch"
    assert float(jnp.max(jnp.abs(x_product - prod_ref))) < 5e-2, "inner-product mismatch"

    print("KERNEL_OK")
</pallas_src>

<mosaic_0001>
module attributes {stable_mosaic.version = 11 : i64} {
  func.func @_linear_kernel(%arg0: i32, %arg1: memref<512x128xbf16, #tpu.memory_space<vmem>>, %arg2: memref<128x128xbf16, #tpu.memory_space<vmem>>, %arg3: memref<512x128xbf16, #tpu.memory_space<vmem>>) attributes {dimension_semantics = [#tpu.dimension_semantics<parallel>], iteration_bounds = array<i64: 1>, scalar_prefetch = 0 : i64, scratch_operands = 0 : i64, tpu.core_type = #tpu.core_type<tc>, window_params = [{transform_indices = @transform_0, window_bounds = array<i64: 512, 128>}, {pipeline_mode = #tpu.pipeline_mode<synchronous>, transform_indices = @transform_1, window_bounds = array<i64: 128, 128>}, {transform_indices = @transform_2, window_bounds = array<i64: 512, 128>}]} {
    %c0 = arith.constant 0 : index
    %c0_0 = arith.constant 0 : index
    %0 = vector.load %arg1[%c0, %c0_0] : memref<512x128xbf16, #tpu.memory_space<vmem>>, vector<512x128xbf16>
    %c0_1 = arith.constant 0 : index
    %c0_2 = arith.constant 0 : index
    %1 = vector.load %arg2[%c0_1, %c0_2] : memref<128x128xbf16, #tpu.memory_space<vmem>>, vector<128x128xbf16>
    %cst = arith.constant dense<0.000000e+00> : vector<512x128xf32>
    %2 = tpu.matmul %0, %1, %cst {dimension_numbers = #tpu.dot_dimension_numbers<[1], [0], [0], [1], [0, 0, 1, 1], [], []>} : vector<512x128xbf16>, vector<128x128xbf16>, vector<512x128xf32> -> vector<512x128xf32>
    %3 = arith.truncf %2 : vector<512x128xf32> to vector<512x128xbf16>
    %c0_3 = arith.constant 0 : index
    %c0_4 = arith.constant 0 : index
    %4 = vector.load %arg3[%c0_3, %c0_4] : memref<512x128xbf16, #tpu.memory_space<vmem>>, vector<512x128xbf16>
    tpu.vector_store %arg3[%c0_3, %c0_4], %3 {strides = array<i32>} : memref<512x128xbf16, #tpu.memory_space<vmem>>, vector<512x128xbf16>,
    return
  }
  func.func @transform_0(%arg0: i32) -> (i32, i32) {
    %c0_i32 = arith.constant 0 : i32
    %c0_i32_0 = arith.constant 0 : i32
    return %arg0, %c0_i32 : i32, i32
  }
  func.func @transform_1(%arg0: i32) -> (i32, i32) {
    %c0_i32 = arith.constant 0 : i32
    %c0_i32_0 = arith.constant 0 : i32
    %c0_i32_1 = arith.constant 0 : i32
    return %c0_i32, %c0_i32_0 : i32, i32
  }
  func.func @transform_2(%arg0: i32) -> (i32, i32) {
    %c0_i32 = arith.constant 0 : i32
    %c0_i32_0 = arith.constant 0 : i32
    return %arg0, %c0_i32 : i32, i32
  }
}

</mosaic_0001>

<llo_original>
// kernel: tpu_custom_call.1
$region0: #{tpu_custom_call.1}
  #allocation0 [shape = 'u32[]', space=smem, size = 0x4, offset = 0x4, fixed_abs, tag = 'smem constant byte address 0x4 - core index']
  #allocation1 [shape = 'u32[72,128]{1,0:T(1,128)}', space=vmem, size = 0x9000, scoped, tag = 'internal scratch']
  %s0 = inlined_call_operand.hbm [shape: bf16[512,128], index: 0, kind: input, shape index: {}]
  %s1 = inlined_call_operand.hbm [shape: bf16[128,128], index: 1, kind: input, shape index: {}]
  %s2 = inlined_call_operand.hbm [shape: bf16[512,128], index: 2, kind: output, shape index: {}]
  %s3 = sld [smem:[#allocation0]]
  $region26: #{tpu_custom_call.1} parent=0
    _
  %s5 = ssub.s32 1, %s3
  %s6 = scalar_select 0, %s5, %s3
  $region1: #{tpu_custom_call.1} parent=0
    #allocation2 [shape = 'u8[131072]{0}', space=vmem, size = 0x20000, scoped, tag = 'input window, operand 0, single buffered']
    #allocation3 [shape = 's32[1]{0}', space=sflag, size = 0x4, scoped, tag = 'scoped memory for tpu_custom_call.1']
    #allocation4 [shape = 's32[1]{0}', space=sflag, size = 0x4, scoped, tag = 'scoped memory for tpu_custom_call.1']
    #allocation5 [shape = 'u8[32768]{0}', space=vmem, size = 0x8000, scoped, tag = 'input window, operand 1, single buffered']
    #allocation6 [shape = 's32[1]{0}', space=sflag, size = 0x4, scoped, tag = 'scoped memory for tpu_custom_call.1']
    #allocation7 [shape = 'u8[131072]{0}', space=vmem, size = 0x20000, scoped, tag = 'output window, operand 0, single buffered']
    %7 = vsyncpa [#allocation3], 0
    %8 = vsyncpa [#allocation6], 0
    %9 = vsyncpa [#allocation4], 0
    // Predicated region
    $region2: #{tpu_custom_call.1} parent=1 // pred_check
      _
    $region3: #{tpu_custom_call.1} parent=1 // pred_check_branch
      %11 = sbr.rel (0) target = $region5
    $region4: #{tpu_custom_call.1} parent=1 // pred_region
      %13 = vsyncadd [#allocation3], 0
      %s14 = sshll.u32 %s0, 4
      %s15 = int_to_ptr.hbm [resolvable:$true] %s14
      %s16 = sshll.u32 [#allocation2], 4
      %s17 = int_to_ptr.vmem [resolvable:$true] %s16
      %22 = dma.hbm_to_vmem [thread:$0]  %s15, 4096, %s17, [#allocation3], 64, 64, 4
    $region5: #{tpu_custom_call.1} parent=1 // pred_fallthru
      _
    // Predicated region
    $region6: #{tpu_custom_call.1} parent=1 // pred_check
      _
    $region7: #{tpu_custom_call.1} parent=1 // pred_check_branch
      %24 = sbr.rel (0) target = $region9
    $region8: #{tpu_custom_call.1} parent=1 // pred_region
      %26 = vsyncadd [#allocation6], 0
      %s27 = sshll.u32 %s1, 4
      %s28 = int_to_ptr.hbm [resolvable:$true] %s27
      %s29 = sshll.u32 [#allocation5], 4
      %s30 = int_to_ptr.vmem [resolvable:$true] %s29
      %35 = dma.hbm_to_vmem [thread:$0]  %s28, 1024, %s30, [#allocation6], 64, 64, 4
    $region9: #{tpu_custom_call.1} parent=1 // pred_fallthru
      _
    // Predicated region
    $region10: #{tpu_custom_call.1} parent=1 // pred_check
      _
    $region11: #{tpu_custom_call.1} parent=1 // pred_check_branch
      %37 = sbr.rel (0) target = $region13
    $region12: #{tpu_custom_call.1} parent=1 // pred_region
      %39 = dma.done [#allocation3], 4096
    $region13: #{tpu_custom_call.1} parent=1 // pred_fallthru
      _
    // Predicated region
    $region14: #{tpu_custom_call.1} parent=1 // pred_check
      _
    $region15: #{tpu_custom_call.1} parent=1 // pred_check_branch
      %41 = sbr.rel (0) target = $region17
    $region16: #{tpu_custom_call.1} parent=1 // pred_region
      %43 = dma.done [#allocation6], 1024
    $region17: #{tpu_custom_call.1} parent=1 // pred_fallthru
      _
    %v44 = vld [vmem:[#allocation2] sm:$0xf]
    %v45 = vld [vmem:[#allocation2 + $0x4] sm:$0xf]
    %v46 = vld [vmem:[#allocation2 + $0x8] sm:$0xf]
    %v47 = vld [vmem:[#allocation2 + $0xc] sm:$0xf]
    %v48 = vld [vmem:[#allocation2 + $0x10] sm:$0xf]
    %v49 = vld [vmem:[#allocation2 + $0x14] sm:$0xf]
    %v50 = vld [vmem:[#allocation2 + $0x18] sm:$0xf]
    %v51 = vld [vmem:[#allocation2 + $0x1c] sm:$0xf]
    %v52 = vld [vmem:[#allocation2 + $0x20] sm:$0xf]
    %v53 = vld [vmem:[#allocation2 + $0x24] sm:$0xf]
    %v54 = vld [vmem:[#allocation2 + $0x28] sm:$0xf]
    %v55 = vld [vmem:[#allocation2 + $0x2c] sm:$0xf]
    %v56 = vld [vmem:[#allocation2 + $0x30] sm:$0xf]
    %v57 = vld [vmem:[#allocation2 + $0x34] sm:$0xf]
    %v58 = vld [vmem:[#allocation2 + $0x38] sm:$0xf]
    %v59 = vld [vmem:[#allocation2 + $0x3c] sm:$0xf]
    %v60 = vld [vmem:[#allocation2 + $0x40] sm:$0xf]
    %v61 = vld [vmem:[#allocation2 + $0x44] sm:$0xf]
    %v62 = vld [vmem:[#allocation2 + $0x48] sm:$0xf]
    %v63 = vld [vmem:[#allocation2 + $0x4c] sm:$0xf]
    %v64 = vld [vmem:[#allocation2 + $0x50] sm:$0xf]
    %v65 = vld [vmem:[#allocation2 + $0x54] sm:$0xf]
    %v66 = vld [vmem:[#allocation2 + $0x58] sm:$0xf]
    %v67 = vld [vmem:[#allocation2 + $0x5c] sm:$0xf]
    %v68 = vld [vmem:[#allocation2 + $0x60] sm:$0xf]
    %v69 = vld [vmem:[#allocation2 + $0x64] sm:$0xf]
    %v70 = vld [vmem:[#allocation2 + $0x68] sm:$0xf]
    %v71 = vld [vmem:[#allocation2 + $0x6c] sm:$0xf]
    %v72 = vld [vmem:[#allocation2 + $0x70] sm:$0xf]
    %v73 = vld [vmem:[#allocation2 + $0x74] sm:$0xf]
    %v74 = vld [vmem:[#allocation2 + $0x78] sm:$0xf]
    %v75 = vld [vmem:[#allocation2 + $0x7c] sm:$0xf]
    %v76 = vld [vmem:[#allocation2 + $0x80] sm:$0xf]
    %v77 = vld [vmem:[#allocation2 + $0x84] sm:$0xf]
    %v78 = vld [vmem:[#allocation2 + $0x88] sm:$0xf]
    %v79 = vld [vmem:[#allocation2 + $0x8c] sm:$0xf]
    %v80 = vld [vmem:[#allocation2 + $0x90] sm:$0xf]
    %v81 = vld [vmem:[#allocation2 + $0x94] sm:$0xf]
    %v82 = vld [vmem:[#allocation2 + $0x98] sm:$0xf]
    %v83 = vld [vmem:[#allocation2 + $0x9c] sm:$0xf]
    %v84 = vld [vmem:[#allocation2 + $0xa0] sm:$0xf]
    %v85 = vld [vmem:[#allocation2 + $0xa4] sm:$0xf]
    %v86 = vld [vmem:[#allocation2 + $0xa8] sm:$0xf]
    %v87 = vld [vmem:[#allocation2 + $0xac] sm:$0xf]
    %v88 = vld [vmem:[#allocation2 + $0xb0] sm:$0xf]
    %v89 = vld [vmem:[#allocation2 + $0xb4] sm:$0xf]
    %v90 = vld [vmem:[#allocation2 + $0xb8] sm:$0xf]
    %v91 = vld [vmem:[#allocation2 + $0xbc] sm:$0xf]
    %v92 = vld [vmem:[#allocation2 + $0xc0] sm:$0xf]
    %v93 = vld [vmem:[#allocation2 + $0xc4] sm:$0xf]
    %v94 = vld [vmem:[#allocation2 + $0xc8] sm:$0xf]
    %v95 = vld [vmem:[#allocation2 + $0xcc] sm:$0xf]
    %v96 = vld [vmem:[#allocation2 + $0xd0] sm:$0xf]
    %v97 = vld [vmem:[#allocation2 + $0xd4] sm:$0xf]
    %v98 = vld [vmem:[#allocation2 + $0xd8] sm:$0xf]
    %v99 = vld [vmem:[#allocation2 + $0xdc] sm:$0xf]
    %v100 = vld [vmem:[#allocation2 + $0xe0] sm:$0xf]
    %v101 = vld [vmem:[#allocation2 + $0xe4] sm:$0xf]
    %v102 = vld [vmem:[#allocation2 + $0xe8] sm:$0xf]
    %v103 = vld [vmem:[#allocation2 + $0xec] sm:$0xf]
    %v104 = vld [vmem:[#allocation2 + $0xf0] sm:$0xf]
    %v105 = vld [vmem:[#allocation2 + $0xf4] sm:$0xf]
    %v106 = vld [vmem:[#allocation2 + $0xf8] sm:$0xf]
    %v107 = vld [vmem:[#allocation2 + $0xfc] sm:$0xf]
    %v108 = vld [vmem:[#allocation5] sm:$0xf]
    %v109 = vld [vmem:[#allocation5 + $0x4] sm:$0xf]
    %v110 = vld [vmem:[#allocation5 + $0x8] sm:$0xf]
    %v111 = vld [vmem:[#allocation5 + $0xc] sm:$0xf]
    %v112 = vld [vmem:[#allocation5 + $0x10] sm:$0xf]
    %v113 = vld [vmem:[#allocation5 + $0x14] sm:$0xf]
    %v114 = vld [vmem:[#allocation5 + $0x18] sm:$0xf]
    %v115 = vld [vmem:[#allocation5 + $0x1c] sm:$0xf]
    %v116 = vld [vmem:[#allocation5 + $0x20] sm:$0xf]
    %v117 = vld [vmem:[#allocation5 + $0x24] sm:$0xf]
    %v118 = vld [vmem:[#allocation5 + $0x28] sm:$0xf]
    %v119 = vld [vmem:[#allocation5 + $0x2c] sm:$0xf]
    %v120 = vld [vmem:[#allocation5 + $0x30] sm:$0xf]
    %v121 = vld [vmem:[#allocation5 + $0x34] sm:$0xf]
    %v122 = vld [vmem:[#allocation5 + $0x38] sm:$0xf]
    %v123 = vld [vmem:[#allocation5 + $0x3c] sm:$0xf]
    %v188 = vunpack.c.l.b16 %v44
    %v189 = vunpack.c.l.b16 %v45
    %v190 = vunpack.c.l.b16 %v46
    %v191 = vunpack.c.l.b16 %v47
    %v192 = vunpack.c.l.b16 %v48
    %v193 = vunpack.c.l.b16 %v49
    %v194 = vunpack.c.l.b16 %v50
    %v195 = vunpack.c.l.b16 %v51
    %v196 = vunpack.c.l.b16 %v52
    %v197 = vunpack.c.l.b16 %v53
    %v198 = vunpack.c.l.b16 %v54
    %v199 = vunpack.c.l.b16 %v55
    %v200 = vunpack.c.l.b16 %v56
    %v201 = vunpack.c.l.b16 %v57
    %v202 = vunpack.c.l.b16 %v58
    %v203 = vunpack.c.l.b16 %v59
    %v204 = vunpack.c.l.b16 %v60
    %v205 = vunpack.c.l.b16 %v61
    %v206 = vunpack.c.l.b16 %v62
    %v207 = vunpack.c.l.b16 %v63
    %v208 = vunpack.c.l.b16 %v64
    %v209 = vunpack.c.l.b16 %v65
    %v210 = vunpack.c.l.b16 %v66
    %v211 = vunpack.c.l.b16 %v67
    %v212 = vunpack.c.l.b16 %v68
    %v213 = vunpack.c.l.b16 %v69
    %v214 = vunpack.c.l.b16 %v70
    %v215 = vunpack.c.l.b16 %v71
    %v216 = vunpack.c.l.b16 %v72
    %v217 = vunpack.c.l.b16 %v73
    %v218 = vunpack.c.l.b16 %v74
    %v219 = vunpack.c.l.b16 %v75
    %v220 = vunpack.c.l.b16 %v76
    %v221 = vunpack.c.l.b16 %v77
    %v222 = vunpack.c.l.b16 %v78
    %v223 = vunpack.c.l.b16 %v79
    %v224 = vunpack.c.l.b16 %v80
    %v225 = vunpack.c.l.b16 %v81
    %v226 = vunpack.c.l.b16 %v82
    %v227 = vunpack.c.l.b16 %v83
    %v228 = vunpack.c.l.b16 %v84
    %v229 = vunpack.c.l.b16 %v85
    %v230 = vunpack.c.l.b16 %v86
    %v231 = vunpack.c.l.b16 %v87
    %v232 = vunpack.c.l.b16 %v88
    %v233 = vunpack.c.l.b16 %v89
    %v234 = vunpack.c.l.b16 %v90
    %v235 = vunpack.c.l.b16 %v91
    %v236 = vunpack.c.l.b16 %v92
    %v237 = vunpack.c.l.b16 %v93
    %v238 = vunpack.c.l.b16 %v94
    %v239 = vunpack.c.l.b16 %v95
    %v240 = vunpack.c.l.b16 %v96
    %v241 = vunpack.c.l.b16 %v97
    %v242 = vunpack.c.l.b16 %v98
    %v243 = vunpack.c.l.b16 %v99
    %v244 = vunpack.c.l.b16 %v100
    %v245 = vunpack.c.l.b16 %v101
    %v246 = vunpack.c.l.b16 %v102
    %v247 = vunpack.c.l.b16 %v103
    %v248 = vunpack.c.l.b16 %v104
    %v249 = vunpack.c.l.b16 %v105
    %v250 = vunpack.c.l.b16 %v106
    %v251 = vunpack.c.l.b16 %v107
    %v252 = vpack.c.b16 %v189, %v188
    %v253 = vpack.c.b16 %v191, %v190
    %v254 = vpack.c.b16 %v193, %v192
    %v255 = vpack.c.b16 %v195, %v194
    %v256 = vpack.c.b16 %v197, %v196
    %v257 = vpack.c.b16 %v199, %v198
    %v258 = vpack.c.b16 %v201, %v200
    %v259 = vpack.c.b16 %v203, %v202
    %v260 = vpack.c.b16 %v205, %v204
    %v261 = vpack.c.b16 %v207, %v206
    %v262 = vpack.c.b16 %v209, %v208
    %v263 = vpack.c.b16 %v211, %v210
    %v264 = vpack.c.b16 %v213, %v212
    %v265 = vpack.c.b16 %v215, %v214
    %v266 = vpack.c.b16 %v217, %v216
    %v267 = vpack.c.b16 %v219, %v218
    %v268 = vpack.c.b16 %v221, %v220
    %v269 = vpack.c.b16 %v223, %v222
    %v270 = vpack.c.b16 %v225, %v224
    %v271 = vpack.c.b16 %v227, %v226
    %v272 = vpack.c.b16 %v229, %v228
    %v273 = vpack.c.b16 %v231, %v230
    %v274 = vpack.c.b16 %v233, %v232
    %v275 = vpack.c.b16 %v235, %v234
    %v276 = vpack.c.b16 %v237, %v236
    %v277 = vpack.c.b16 %v239, %v238
    %v278 = vpack.c.b16 %v241, %v240
    %v279 = vpack.c.b16 %v243, %v242
    %v280 = vpack.c.b16 %v245, %v244
    %v281 = vpack.c.b16 %v247, %v246
    %v282 = vpack.c.b16 %v249, %v248
    %v283 = vpack.c.b16 %v251, %v250
    %v332 = vunpack.c.l.b16 %v108
    %v333 = vunpack.c.l.b16 %v109
    %v334 = vunpack.c.l.b16 %v110
    %v335 = vunpack.c.l.b16 %v111
    %v336 = vunpack.c.l.b16 %v112
    %v337 = vunpack.c.l.b16 %v113
    %v338 = vunpack.c.l.b16 %v114
    %v339 = vunpack.c.l.b16 %v115
    %v340 = vunpack.c.l.b16 %v116
    %v341 = vunpack.c.l.b16 %v117
    %v342 = vunpack.c.l.b16 %v118
    %v343 = vunpack.c.l.b16 %v119
    %v344 = vunpack.c.l.b16 %v120
    %v345 = vunpack.c.l.b16 %v121
    %v346 = vunpack.c.l.b16 %v122
    %v347 = vunpack.c.l.b16 %v123
    %v348 = vpack.c.b16 %v333, %v332
    %v349 = vpack.c.b16 %v335, %v334
    %v350 = vpack.c.b16 %v337, %v336
    %v351 = vpack.c.b16 %v339, %v338
    %v352 = vpack.c.b16 %v341, %v340
    %v353 = vpack.c.b16 %v343, %v342
    %v354 = vpack.c.b16 %v345, %v344
    %v355 = vpack.c.b16 %v347, %v346
    %364 = vmatpush.bf16.msra.mxu0 %v355
    %365 = vmatpush.bf16.msra.mxu0 %v354
    %366 = vmatpush.bf16.msra.mxu0 %v353
    %367 = vmatpush.bf16.msra.mxu0 %v352
    %368 = vmatpush.bf16.msra.mxu0 %v351
    %369 = vmatpush.bf16.msra.mxu0 %v350
    %370 = vmatpush.bf16.msra.mxu0 %v349
    %371 = vmatpush.bf16.msra.mxu0 %v348
    %372 = vmatmul.bf16.gmra.mxu0 %v252
    %v373 = vpop.f32.mrf.mxu0
    %v374 = vadd.f32 0.0, %v373
    %v375 = vpop.f32.mrf.mxu0
    %v376 = vadd.f32 0.0, %v375
    %377 = vmatmul.bf16.gmra.mxu0 %v253
    %v378 = vpop.f32.mrf.mxu0
    %v379 = vadd.f32 0.0, %v378
    %v380 = vpop.f32.mrf.mxu0
    %v381 = vadd.f32 0.0, %v380
    %382 = vmatmul.bf16.gmra.mxu0 %v254
    %v383 = vpop.f32.mrf.mxu0
    %v384 = vadd.f32 0.0, %v383
    %v385 = vpop.f32.mrf.mxu0
    %v386 = vadd.f32 0.0, %v385
    %387 = vmatmul.bf16.gmra.mxu0 %v255
    %v388 = vpop.f32.mrf.mxu0
    %v389 = vadd.f32 0.0, %v388
    %v390 = vpop.f32.mrf.mxu0
    %v391 = vadd.f32 0.0, %v390
    %392 = vmatmul.bf16.gmra.mxu0 %v256
    %v393 = vpop.f32.mrf.mxu0
    %v394 = vadd.f32 0.0, %v393
    %v395 = vpop.f32.mrf.mxu0
    %v396 = vadd.f32 0.0, %v395
    %397 = vmatmul.bf16.gmra.mxu0 %v257
    %v398 = vpop.f32.mrf.mxu0
    %v399 = vadd.f32 0.0, %v398
    %v400 = vpop.f32.mrf.mxu0
    %v401 = vadd.f32 0.0, %v400
    %402 = vmatmul.bf16.gmra.mxu0 %v258
    %v403 = vpop.f32.mrf.mxu0
    %v404 = vadd.f32 0.0, %v403
    %v405 = vpop.f32.mrf.mxu0
    %v406 = vadd.f32 0.0, %v405
    %407 = vmatmul.bf16.gmra.mxu0 %v259
    %v408 = vpop.f32.mrf.mxu0
    %v409 = vadd.f32 0.0, %v408
    %v410 = vpop.f32.mrf.mxu0
    %v411 = vadd.f32 0.0, %v410
    %412 = vmatmul.bf16.gmra.mxu0 %v260
    %v413 = vpop.f32.mrf.mxu0
    %v414 = vadd.f32 0.0, %v413
    %v415 = vpop.f32.mrf.mxu0
    %v416 = vadd.f32 0.0, %v415
    %417 = vmatmul.bf16.gmra.mxu0 %v261
    %v418 = vpop.f32.mrf.mxu0
    %v419 = vadd.f32 0.0, %v418
    %v420 = vpop.f32.mrf.mxu0
    %v421 = vadd.f32 0.0, %v420
    %422 = vmatmul.bf16.gmra.mxu0 %v262
    %v423 = vpop.f32.mrf.mxu0
    %v424 = vadd.f32 0.0, %v423
    %v425 = vpop.f32.mrf.mxu0
    %v426 = vadd.f32 0.0, %v425
    %427 = vmatmul.bf16.gmra.mxu0 %v263
    %v428 = vpop.f32.mrf.mxu0
    %v429 = vadd.f32 0.0, %v428
    %v430 = vpop.f32.mrf.mxu0
    %v431 = vadd.f32 0.0, %v430
    %432 = vmatmul.bf16.gmra.mxu0 %v264
    %v433 = vpop.f32.mrf.mxu0
    %v434 = vadd.f32 0.0, %v433
    %v435 = vpop.f32.mrf.mxu0
    %v436 = vadd.f32 0.0, %v435
    %437 = vmatmul.bf16.gmra.mxu0 %v265
    %v438 = vpop.f32.mrf.mxu0
    %v439 = vadd.f32 0.0, %v438
    %v440 = vpop.f32.mrf.mxu0
    %v441 = vadd.f32 0.0, %v440
    %442 = vmatmul.bf16.gmra.mxu0 %v266
    %v443 = vpop.f32.mrf.mxu0
    %v444 = vadd.f32 0.0, %v443
    %v445 = vpop.f32.mrf.mxu0
    %v446 = vadd.f32 0.0, %v445
    %447 = vmatmul.bf16.gmra.mxu0 %v267
    %v448 = vpop.f32.mrf.mxu0
    %v449 = vadd.f32 0.0, %v448
    %v450 = vpop.f32.mrf.mxu0
    %v451 = vadd.f32 0.0, %v450
    %452 = vmatmul.bf16.gmra.mxu0 %v268
    %v453 = vpop.f32.mrf.mxu0
    %v454 = vadd.f32 0.0, %v453
    %v455 = vpop.f32.mrf.mxu0
    %v456 = vadd.f32 0.0, %v455
    %457 = vmatmul.bf16.gmra.mxu0 %v269
    %v458 = vpop.f32.mrf.mxu0
    %v459 = vadd.f32 0.0, %v458
    %v460 = vpop.f32.mrf.mxu0
    %v461 = vadd.f32 0.0, %v460
    %462 = vmatmul.bf16.gmra.mxu0 %v270
    %v463 = vpop.f32.mrf.mxu0
    %v464 = vadd.f32 0.0, %v463
    %v465 = vpop.f32.mrf.mxu0
    %v466 = vadd.f32 0.0, %v465
    %467 = vmatmul.bf16.gmra.mxu0 %v271
    %v468 = vpop.f32.mrf.mxu0
    %v469 = vadd.f32 0.0, %v468
    %v470 = vpop.f32.mrf.mxu0
    %v471 = vadd.f32 0.0, %v470
    %472 = vmatmul.bf16.gmra.mxu0 %v272
    %v473 = vpop.f32.mrf.mxu0
    %v474 = vadd.f32 0.0, %v473
    %v475 = vpop.f32.mrf.mxu0
    %v476 = vadd.f32 0.0, %v475
    %477 = vmatmul.bf16.gmra.mxu0 %v273
    %v478 = vpop.f32.mrf.mxu0
    %v479 = vadd.f32 0.0, %v478
    %v480 = vpop.f32.mrf.mxu0
    %v481 = vadd.f32 0.0, %v480
    %482 = vmatmul.bf16.gmra.mxu0 %v274
    %v483 = vpop.f32.mrf.mxu0
    %v484 = vadd.f32 0.0, %v483
    %v485 = vpop.f32.mrf.mxu0
    %v486 = vadd.f32 0.0, %v485
    %487 = vmatmul.bf16.gmra.mxu0 %v275
    %v488 = vpop.f32.mrf.mxu0
    %v489 = vadd.f32 0.0, %v488
    %v490 = vpop.f32.mrf.mxu0
    %v491 = vadd.f32 0.0, %v490
    %492 = vmatmul.bf16.gmra.mxu0 %v276
    %v493 = vpop.f32.mrf.mxu0
    %v494 = vadd.f32 0.0, %v493
    %v495 = vpop.f32.mrf.mxu0
    %v496 = vadd.f32 0.0, %v495
    %497 = vmatmul.bf16.gmra.mxu0 %v277
    %v498 = vpop.f32.mrf.mxu0
    %v499 = vadd.f32 0.0, %v498
    %v500 = vpop.f32.mrf.mxu0
    %v501 = vadd.f32 0.0, %v500
    %502 = vmatmul.bf16.gmra.mxu0 %v278
    %v503 = vpop.f32.mrf.mxu0
    %v504 = vadd.f32 0.0, %v503
    %v505 = vpop.f32.mrf.mxu0
    %v506 = vadd.f32 0.0, %v505
    %507 = vmatmul.bf16.gmra.mxu0 %v279
    %v508 = vpop.f32.mrf.mxu0
    %v509 = vadd.f32 0.0, %v508
    %v510 = vpop.f32.mrf.mxu0
    %v511 = vadd.f32 0.0, %v510
    %512 = vmatmul.bf16.gmra.mxu0 %v280
    %v513 = vpop.f32.mrf.mxu0
    %v514 = vadd.f32 0.0, %v513
    %v515 = vpop.f32.mrf.mxu0
    %v516 = vadd.f32 0.0, %v515
    %517 = vmatmul.bf16.gmra.mxu0 %v281
    %v518 = vpop.f32.mrf.mxu0
    %v519 = vadd.f32 0.0, %v518
    %v520 = vpop.f32.mrf.mxu0
    %v521 = vadd.f32 0.0, %v520
    %522 = vmatmul.bf16.gmra.mxu0 %v282
    %v523 = vpop.f32.mrf.mxu0
    %v524 = vadd.f32 0.0, %v523
    %v525 = vpop.f32.mrf.mxu0
    %v526 = vadd.f32 0.0, %v525
    %527 = vmatmul.bf16.gmra.mxu0 %v283
    %v528 = vpop.f32.mrf.mxu0
    %v529 = vadd.f32 0.0, %v528
    %v530 = vpop.f32.mrf.mxu0
    %v531 = vadd.f32 0.0, %v530
    %532 = vdwg.mxu0
    %v533 = vpack.c.bf16 %v374, %v374
    %v534 = vpack.c.bf16 %v376, %v376
    %v535 = vpack.c.bf16 %v379, %v379
    %v536 = vpack.c.bf16 %v381, %v381
    %v537 = vpack.c.bf16 %v384, %v384
    %v538 = vpack.c.bf16 %v386, %v386
    %v539 = vpack.c.bf16 %v389, %v389
    %v540 = vpack.c.bf16 %v391, %v391
    %v541 = vpack.c.bf16 %v394, %v394
    %v542 = vpack.c.bf16 %v396, %v396
    %v543 = vpack.c.bf16 %v399, %v399
    %v544 = vpack.c.bf16 %v401, %v401
    %v545 = vpack.c.bf16 %v404, %v404
    %v546 = vpack.c.bf16 %v406, %v406
    %v547 = vpack.c.bf16 %v409, %v409
    %v548 = vpack.c.bf16 %v411, %v411
    %v549 = vpack.c.bf16 %v414, %v414
    %v550 = vpack.c.bf16 %v416, %v416
    %v551 = vpack.c.bf16 %v419, %v419
    %v552 = vpack.c.bf16 %v421, %v421
    %v553 = vpack.c.bf16 %v424, %v424
    %v554 = vpack.c.bf16 %v426, %v426
    %v555 = vpack.c.bf16 %v429, %v429
    %v556 = vpack.c.bf16 %v431, %v431
    %v557 = vpack.c.bf16 %v434, %v434
    %v558 = vpack.c.bf16 %v436, %v436
    %v559 = vpack.c.bf16 %v439, %v439
    %v560 = vpack.c.bf16 %v441, %v441
    %v561 = vpack.c.bf16 %v444, %v444
    %v562 = vpack.c.bf16 %v446, %v446
    %v563 = vpack.c.bf16 %v449, %v449
    %v564 = vpack.c.bf16 %v451, %v451
    %v565 = vpack.c.bf16 %v454, %v454
    %v566 = vpack.c.bf16 %v456, %v456
    %v567 = vpack.c.bf16 %v459, %v459
    %v568 = vpack.c.bf16 %v461, %v461
    %v569 = vpack.c.bf16 %v464, %v464
    %v570 = vpack.c.bf16 %v466, %v466
    %v571 = vpack.c.bf16 %v469, %v469
    %v572 = vpack.c.bf16 %v471, %v471
    %v573 = vpack.c.bf16 %v474, %v474
    %v574 = vpack.c.bf16 %v476, %v476
    %v575 = vpack.c.bf16 %v479, %v479
    %v576 = vpack.c.bf16 %v481, %v481
    %v577 = vpack.c.bf16 %v484, %v484
    %v578 = vpack.c.bf16 %v486, %v486
    %v579 = vpack.c.bf16 %v489, %v489
    %v580 = vpack.c.bf16 %v491, %v491
    %v581 = vpack.c.bf16 %v494, %v494
    %v582 = vpack.c.bf16 %v496, %v496
    %v583 = vpack.c.bf16 %v499, %v499
    %v584 = vpack.c.bf16 %v501, %v501
    %v585 = vpack.c.bf16 %v504, %v504
    %v586 = vpack.c.bf16 %v506, %v506
    %v587 = vpack.c.bf16 %v509, %v509
    %v588 = vpack.c.bf16 %v511, %v511
    %v589 = vpack.c.bf16 %v514, %v514
    %v590 = vpack.c.bf16 %v516, %v516
    %v591 = vpack.c.bf16 %v519, %v519
    %v592 = vpack.c.bf16 %v521, %v521
    %v593 = vpack.c.bf16 %v524, %v524
    %v594 = vpack.c.bf16 %v526, %v526
    %v595 = vpack.c.bf16 %v529, %v529
    %v596 = vpack.c.bf16 %v531, %v531
    %597 = vst [vmem:[#allocation7] sm:$0xf] %v533
    %598 = vst [vmem:[#allocation7 + $0x4] sm:$0xf] %v534
    %599 = vst [vmem:[#allocation7 + $0x8] sm:$0xf] %v535
    %600 = vst [vmem:[#allocation7 + $0xc] sm:$0xf] %v536
    %601 = vst [vmem:[#allocation7 + $0x10] sm:$0xf] %v537
    %602 = vst [vmem:[#allocation7 + $0x14] sm:$0xf] %v538
    %603 = vst [vmem:[#allocation7 + $0x18] sm:$0xf] %v539
    %604 = vst [vmem:[#allocation7 + $0x1c] sm:$0xf] %v540
    %605 = vst [vmem:[#allocation7 + $0x20] sm:$0xf] %v541
    %606 = vst [vmem:[#allocation7 + $0x24] sm:$0xf] %v542
    %607 = vst [vmem:[#allocation7 + $0x28] sm:$0xf] %v543
    %608 = vst [vmem:[#allocation7 + $0x2c] sm:$0xf] %v544
    %609 = vst [vmem:[#allocation7 + $0x30] sm:$0xf] %v545
    %610 = vst [vmem:[#allocation7 + $0x34] sm:$0xf] %v546
    %611 = vst [vmem:[#allocation7 + $0x38] sm:$0xf] %v547
    %612 = vst [vmem:[#allocation7 + $0x3c] sm:$0xf] %v548
    %613 = vst [vmem:[#allocation7 + $0x40] sm:$0xf] %v549
    %614 = vst [vmem:[#allocation7 + $0x44] sm:$0xf] %v550
    %615 = vst [vmem:[#allocation7 + $0x48] sm:$0xf] %v551
    %616 = vst [vmem:[#allocation7 + $0x4c] sm:$0xf] %v552
    %617 = vst [vmem:[#allocation7 + $0x50] sm:$0xf] %v553
    %618 = vst [vmem:[#allocation7 + $0x54] sm:$0xf] %v554
    %619 = vst [vmem:[#allocation7 + $0x58] sm:$0xf] %v555
    %620 = vst [vmem:[#allocation7 + $0x5c] sm:$0xf] %v556
    %621 = vst [vmem:[#allocation7 + $0x60] sm:$0xf] %v557
    %622 = vst [vmem:[#allocation7 + $0x64] sm:$0xf] %v558
    %623 = vst [vmem:[#allocation7 + $0x68] sm:$0xf] %v559
    %624 = vst [vmem:[#allocation7 + $0x6c] sm:$0xf] %v560
    %625 = vst [vmem:[#allocation7 + $0x70] sm:$0xf] %v561
    %626 = vst [vmem:[#allocation7 + $0x74] sm:$0xf] %v562
    %627 = vst [vmem:[#allocation7 + $0x78] sm:$0xf] %v563
    %628 = vst [vmem:[#allocation7 + $0x7c] sm:$0xf] %v564
    %629 = vst [vmem:[#allocation7 + $0x80] sm:$0xf] %v565
    %630 = vst [vmem:[#allocation7 + $0x84] sm:$0xf] %v566
    %631 = vst [vmem:[#allocation7 + $0x88] sm:$0xf] %v567
    %632 = vst [vmem:[#allocation7 + $0x8c] sm:$0xf] %v568
    %633 = vst [vmem:[#allocation7 + $0x90] sm:$0xf] %v569
    %634 = vst [vmem:[#allocation7 + $0x94] sm:$0xf] %v570
    %635 = vst [vmem:[#allocation7 + $0x98] sm:$0xf] %v571
    %636 = vst [vmem:[#allocation7 + $0x9c] sm:$0xf] %v572
    %637 = vst [vmem:[#allocation7 + $0xa0] sm:$0xf] %v573
    %638 = vst [vmem:[#allocation7 + $0xa4] sm:$0xf] %v574
    %639 = vst [vmem:[#allocation7 + $0xa8] sm:$0xf] %v575
    %640 = vst [vmem:[#allocation7 + $0xac] sm:$0xf] %v576
    %641 = vst [vmem:[#allocation7 + $0xb0] sm:$0xf] %v577
    %642 = vst [vmem:[#allocation7 + $0xb4] sm:$0xf] %v578
    %643 = vst [vmem:[#allocation7 + $0xb8] sm:$0xf] %v579
    %644 = vst [vmem:[#allocation7 + $0xbc] sm:$0xf] %v580
    %645 = vst [vmem:[#allocation7 + $0xc0] sm:$0xf] %v581
    %646 = vst [vmem:[#allocation7 + $0xc4] sm:$0xf] %v582
    %647 = vst [vmem:[#allocation7 + $0xc8] sm:$0xf] %v583
    %648 = vst [vmem:[#allocation7 + $0xcc] sm:$0xf] %v584
    %649 = vst [vmem:[#allocation7 + $0xd0] sm:$0xf] %v585
    %650 = vst [vmem:[#allocation7 + $0xd4] sm:$0xf] %v586
    %651 = vst [vmem:[#allocation7 + $0xd8] sm:$0xf] %v587
    %652 = vst [vmem:[#allocation7 + $0xdc] sm:$0xf] %v588
    %653 = vst [vmem:[#allocation7 + $0xe0] sm:$0xf] %v589
    %654 = vst [vmem:[#allocation7 + $0xe4] sm:$0xf] %v590
    %655 = vst [vmem:[#allocation7 + $0xe8] sm:$0xf] %v591
    %656 = vst [vmem:[#allocation7 + $0xec] sm:$0xf] %v592
    %657 = vst [vmem:[#allocation7 + $0xf0] sm:$0xf] %v593
    %658 = vst [vmem:[#allocation7 + $0xf4] sm:$0xf] %v594
    %659 = vst [vmem:[#allocation7 + $0xf8] sm:$0xf] %v595
    %660 = vst [vmem:[#allocation7 + $0xfc] sm:$0xf] %v596
    // Predicated region
    $region18: #{tpu_custom_call.1} parent=1 // pred_check
      _
    $region19: #{tpu_custom_call.1} parent=1 // pred_check_branch
      %662 = sbr.rel (0) target = $region21
    $region20: #{tpu_custom_call.1} parent=1 // pred_region
      %664 = vsyncadd [#allocation4], 0
      %s665 = sshll.u32 [#allocation7], 4
      %s666 = int_to_ptr.vmem [resolvable:$true] %s665
      %s667 = sshll.u32 %s2, 4
      %s668 = int_to_ptr.hbm [resolvable:$true] %s667
      %673 = dma.vmem_to_hbm [thread:$0]  %s666, 4096, %s668, [#allocation4], 64, 64, 4
    $region21: #{tpu_custom_call.1} parent=1 // pred_fallthru
      _
    // Predicated region
    $region22: #{tpu_custom_call.1} parent=1 // pred_check
      _
    $region23: #{tpu_custom_call.1} parent=1 // pred_check_branch
      %675 = sbr.rel (0) target = $region25
    $region24: #{tpu_custom_call.1} parent=1 // pred_region
      %677 = dma.done [#allocation4], 4096
    $region25: #{tpu_custom_call.1} parent=1 // pred_fallthru
      _
    %678 = vsyncpa [#allocation3], 1
    %679 = vsyncpa [#allocation6], 1
    %680 = vsyncpa [#allocation4], 1

</llo_original>
